<compile_context>
chip_gen: v6e
topology: v6e:2x2x1
jax: 0.10.0
libtpu: 0.0.40
codegen_flags: <defaults>
</compile_context>

<pallas_src>
import functools

import jax
import jax.numpy as jnp
from jax.experimental import pallas as pl
from jax.experimental.pallas import tpu as pltpu


# -----------------------------------------------------------------------------
# Fused teacher-stub + classifier-free-guidance kernel
# -----------------------------------------------------------------------------
def _fused_teacher_cfg_kernel(t_ref, g_ref, cu_ref, cc_ref, w_ref,
                              z_ref, out_ref, *, b, c):
    # TODO(synk): the real teacher is a diffusers UNet2DConditionModel (not
    # translatable here); this deterministic linear stand-in (1x1-conv channel
    # mix + pooled-text / timestep conditioning) exercises the full
    # _query_teacher CFG pipeline on-device.
    #
    # Refs:
    #   t_ref  : SMEM (b,)    timestep / num_train_timesteps, per sample
    #   g_ref  : SMEM (b,)    guidance scale, per sample
    #   cu_ref : SMEM (b*c,)  uncond conditioning bias, row = n*c + ch
    #   cc_ref : SMEM (b*c,)  cond   conditioning bias, row = n*c + ch
    #   w_ref  : SMEM (c*c,)  channel-mix weights, row-major (c_out, c_in)
    #   z_ref  : VMEM (b*c, lane_tile)   latents, rows ordered (sample, channel)
    #   out    : VMEM (b*c, lane_tile)   CFG-combined noise prediction
    for n in range(b):                       # static unroll over samples
        t_s = t_ref[n]
        g = g_ref[n]
        # Load this sample's channel rows once; reused for every output channel.
        zrows = [z_ref[pl.ds(n * c + ci, 1), :] for ci in range(c)]
        for co in range(c):                  # static unroll over out channels
            # Channel mix on the VPU (scalar-broadcast FMAs), no MXU.
            mix = w_ref[co * c] * zrows[0]
            for ci in range(1, c):
                mix = mix + w_ref[co * c + ci] * zrows[ci]
            # Teacher stub output for the uncond / cond halves of the "batch"
            # (they share `mix` because z is identical for both halves — the
            # CFG z-concat of the reference is therefore redundant here).
            u_row = mix + (cu_ref[n * c + co] + t_s)
            c_row = mix + (cc_ref[n * c + co] + t_s)
            # noise_pred = (1 - g) * noise_pred_uncond + g * noise_pred_cond
            out_ref[pl.ds(n * c + co, 1), :] = (
                (1.0 - g) * u_row + g * c_row).astype(out_ref.dtype)


def fused_teacher_cfg(z2d, t_scaled, g_vec, cond_u_flat, cond_c_flat, w_flat, *, b):
    """z2d: (B*C, HW) float32, rows ordered (sample, channel). Returns same shape."""
    bc, hw = z2d.shape
    c = bc // b
    # Lane tiling only matters for real audio-latent sizes; at toy HW this is a
    # single dense step (avoids per-step pipeline overhead).  Tiles keep
    # double-buffered VMEM small enough for v7x's 64 MiB.
    if hw > 2048 and hw % 2048 == 0:
        tile = 2048
    else:
        tile = hw
    grid = (hw // tile,)

    kernel = functools.partial(_fused_teacher_cfg_kernel, b=b, c=c)
    smem = pl.BlockSpec(memory_space=pltpu.MemorySpace.SMEM)
    return pl.pallas_call(
        kernel,
        out_shape=jax.ShapeDtypeStruct((bc, hw), jnp.float32),
        grid=grid,
        in_specs=[
            smem,                                         # t_scaled  (b,)
            smem,                                         # g         (b,)
            smem,                                         # cond_u    (b*c,)
            smem,                                         # cond_c    (b*c,)
            smem,                                         # w_ch      (c*c,)
            pl.BlockSpec((bc, tile), lambda j: (0, j)),   # z
        ],
        out_specs=pl.BlockSpec((bc, tile), lambda j: (0, j)),
        compiler_params=pltpu.CompilerParams(
            dimension_semantics=("parallel",)),           # v7x: 2 TCs can split lanes
    )(t_scaled, g_vec, cond_u_flat, cond_c_flat, w_flat, z2d)


# -----------------------------------------------------------------------------
# Module wrapper (glue / parameter setup in plain JAX)
# -----------------------------------------------------------------------------
class AudioDistilledModelPallas:
    def __init__(
        self,
        key,
        latent_channels=4,
        text_dim=32,
        teacher_guidance_scale=3.0,
        num_train_timesteps=1000,
        snr_gamma=None,
        ema_decay=0.999,
        freeze_text_encoder=True,
    ):
        self.teacher_guidance_scale = teacher_guidance_scale
        self.max_rand_guidance_scale = 6
        self.snr_gamma = snr_gamma
        self.ema_decay = ema_decay
        self.freeze_text_encoder = freeze_text_encoder
        self.num_train_timesteps = num_train_timesteps
        # TODO(synk): CLIP/T5 tokenizer + text encoder and the diffusers UNets
        # are external pretrained models with no clean Pallas equivalent; the
        # synthetic teacher-stub weights below stand in for them.
        k1, k2 = jax.random.split(key)
        self.w_ch = 0.2 * jax.random.normal(
            k1, (latent_channels, latent_channels), jnp.float32)
        self.w_text = 0.05 * jax.random.normal(
            k2, (text_dim, latent_channels), jnp.float32)
        # DDPM-style linear beta schedule (deterministic, no checkpoint).
        betas = jnp.linspace(1e-4, 0.02, num_train_timesteps, dtype=jnp.float32)
        self.alphas_cumprod = jnp.cumprod(1.0 - betas)

    @property
    def use_teacher_cf_guidance(self):
        return self.teacher_guidance_scale == -1 or self.teacher_guidance_scale > 1.0

    def compute_snr(self, timesteps):
        # Plain JAX (per perf review): a pallas_call for B scalar gathers is
        # pure dispatch overhead.  Clamp so an out-of-range timestep cannot
        # silently gather garbage.
        t = jnp.clip(jnp.asarray(timesteps, jnp.int32), 0,
                     self.alphas_cumprod.shape[0] - 1)
        acp = self.alphas_cumprod[t]
        return acp / (1.0 - acp)        # == (sqrt(acp)/sqrt(1-acp))**2

    def _pooled_cond(self, prompt_embeds, prompt_mask):
        """Masked mean-pool + linear projection -> (N, C) conditioning biases."""
        mask = prompt_mask.astype(jnp.float32)
        pooled = jnp.sum(prompt_embeds * mask[..., None], axis=1) / jnp.maximum(
            jnp.sum(mask, axis=1, keepdims=True), 1.0)
        return pooled @ self.w_text

    def _query_teacher(self, z_scaled, t, prompt_embeds, prompt_mask,
                       guidance_scale=None):
        b, c, h, w = z_scaled.shape
        hw = h * w
        use_cf = self.use_teacher_cf_guidance

        # Per-sample timesteps, scaled by 1/num_train_timesteps.
        t = jnp.asarray(t, jnp.float32).reshape(-1)
        if t.shape[0] == 1:
            t = jnp.broadcast_to(t, (b,))
        assert t.shape[0] == b, f"expected {b} timesteps, got {t.shape[0]}"
        t_scaled = t * (1.0 / float(self.num_train_timesteps))

        # prompt_embeds ordering contract: [uncond; cond] along the batch when
        # classifier-free guidance is active.
        expected_rows = 2 * b if use_cf else b
        assert prompt_embeds.shape[0] == expected_rows, (
            f"prompt_embeds must have {expected_rows} rows "
            f"({'[uncond; cond]' if use_cf else 'cond only'}), "
            f"got {prompt_embeds.shape[0]}")

        cond = self._pooled_cond(prompt_embeds, prompt_mask)      # (N, C)

        if use_cf:
            cond_u, cond_c = cond[:b], cond[b:]
            if self.teacher_guidance_scale == -1:
                assert guidance_scale is not None, (
                    "guidance_scale is required when teacher_guidance_scale == -1")
                g_vec = jnp.asarray(guidance_scale, jnp.float32).reshape(-1)
                g_vec = jnp.broadcast_to(g_vec, (b,))
            else:
                g_vec = jnp.full((b,), float(self.teacher_guidance_scale),
                                 jnp.float32)
        else:
            # No CFG: with g = 1 the in-kernel combine degenerates to the
            # single conditional teacher pass.
            cond_u = cond_c = cond
            g_vec = jnp.ones((b,), jnp.float32)

        z2d = z_scaled.astype(jnp.float32).reshape(b * c, hw)     # rows = (n, ch)
        out = fused_teacher_cfg(
            z2d, t_scaled, g_vec,
            cond_u.astype(jnp.float32).reshape(-1),
            cond_c.astype(jnp.float32).reshape(-1),
            self.w_ch.reshape(-1),
            b=b)
        return out.reshape(b, c, h, w)


# -----------------------------------------------------------------------------
if __name__ == "__main__":
    key = jax.random.PRNGKey(0)
    kz, ke, kp = jax.random.split(key, 3)

    B, C, H, W, S, D = 2, 4, 16, 16, 8, 32
    model = AudioDistilledModelPallas(
        kp, latent_channels=C, text_dim=D, teacher_guidance_scale=3.0)

    z_0 = jax.random.normal(kz, (B, C, H, W), jnp.float32)
    # CFG: prompt_embeds carries [uncond; cond] along the batch -> 2B rows.
    prompt_embeds = jax.random.normal(ke, (2 * B, S, D), jnp.float32)
    prompt_mask = jnp.ones((2 * B, S), jnp.float32).at[:, S - 2:].set(0.0)

    timesteps_f = jnp.array([100.0, 900.0], jnp.float32)
    noise_pred = model._query_teacher(z_0, timesteps_f, prompt_embeds, prompt_mask)

    timesteps_i = jnp.array([100, 900], jnp.int32)
    snr = model.compute_snr(timesteps_i)

    jax.block_until_ready((noise_pred, snr))
    assert noise_pred.shape == (B, C, H, W)
    assert snr.shape == (B,)
    assert not bool(jnp.isnan(noise_pred).any())

    # Plain-JAX reference for the fused kernel (teacher stub + CFG combine).
    cond = model._pooled_cond(prompt_embeds, prompt_mask)
    cond_u, cond_c = cond[:B], cond[B:]
    g = float(model.teacher_guidance_scale)
    t_s = timesteps_f / float(model.num_train_timesteps)
    mix = jnp.einsum("oi,bis->bos", model.w_ch, z_0.reshape(B, C, H * W))
    ref = (mix + (1.0 - g) * cond_u[:, :, None] + g * cond_c[:, :, None]
           + t_s[:, None, None]).reshape(B, C, H, W)
    assert bool(jnp.allclose(noise_pred, ref, atol=1e-5, rtol=1e-5)), \
        "fused kernel mismatch vs reference"

    print("KERNEL_OK")
</pallas_src>

<mosaic_0001>
module attributes {stable_mosaic.version = 11 : i64} {
  func.func @_fused_teacher_cfg_kernel(%arg0: i32, %arg1: memref<2xf32, #tpu.memory_space<smem>>, %arg2: memref<2xf32, #tpu.memory_space<smem>>, %arg3: memref<8xf32, #tpu.memory_space<smem>>, %arg4: memref<8xf32, #tpu.memory_space<smem>>, %arg5: memref<16xf32, #tpu.memory_space<smem>>, %arg6: memref<8x256xf32, #tpu.memory_space<vmem>>, %arg7: memref<8x256xf32, #tpu.memory_space<vmem>>) attributes {dimension_semantics = [#tpu.dimension_semantics<parallel>], iteration_bounds = array<i64: 1>, scalar_prefetch = 0 : i64, scratch_operands = 0 : i64, tpu.core_type = #tpu.core_type<tc>, window_params = [{transform_indices = @transform_0, window_bounds = array<i64: 2>}, {transform_indices = @transform_1, window_bounds = array<i64: 2>}, {transform_indices = @transform_2, window_bounds = array<i64: 8>}, {transform_indices = @transform_3, window_bounds = array<i64: 8>}, {transform_indices = @transform_4, window_bounds = array<i64: 16>}, {transform_indices = @transform_5, window_bounds = array<i64: 8, 256>}, {transform_indices = @transform_6, window_bounds = array<i64: 8, 256>}]} {
    %c0 = arith.constant 0 : index
    %0 = memref.load %arg1[%c0] : memref<2xf32, #tpu.memory_space<smem>>
    %c0_0 = arith.constant 0 : index
    %1 = memref.load %arg2[%c0_0] : memref<2xf32, #tpu.memory_space<smem>>
    %c0_1 = arith.constant 0 : index
    %c0_2 = arith.constant 0 : index
    %2 = vector.load %arg6[%c0_1, %c0_2] : memref<8x256xf32, #tpu.memory_space<vmem>>, vector<1x256xf32>
    %c1 = arith.constant 1 : index
    %c0_3 = arith.constant 0 : index
    %3 = vector.load %arg6[%c1, %c0_3] : memref<8x256xf32, #tpu.memory_space<vmem>>, vector<1x256xf32>
    %c2 = arith.constant 2 : index
    %c0_4 = arith.constant 0 : index
    %4 = vector.load %arg6[%c2, %c0_4] : memref<8x256xf32, #tpu.memory_space<vmem>>, vector<1x256xf32>
    %c3 = arith.constant 3 : index
    %c0_5 = arith.constant 0 : index
    %5 = vector.load %arg6[%c3, %c0_5] : memref<8x256xf32, #tpu.memory_space<vmem>>, vector<1x256xf32>
    %c0_6 = arith.constant 0 : index
    %6 = memref.load %arg5[%c0_6] : memref<16xf32, #tpu.memory_space<smem>>
    %7 = vector.broadcast %6 : f32 to vector<1x256xf32>
    %8 = arith.mulf %7, %2 : vector<1x256xf32>
    %c1_7 = arith.constant 1 : index
    %9 = memref.load %arg5[%c1_7] : memref<16xf32, #tpu.memory_space<smem>>
    %10 = vector.broadcast %9 : f32 to vector<1x256xf32>
    %11 = arith.mulf %10, %3 : vector<1x256xf32>
    %12 = arith.addf %8, %11 : vector<1x256xf32>
    %c2_8 = arith.constant 2 : index
    %13 = memref.load %arg5[%c2_8] : memref<16xf32, #tpu.memory_space<smem>>
    %14 = vector.broadcast %13 : f32 to vector<1x256xf32>
    %15 = arith.mulf %14, %4 : vector<1x256xf32>
    %16 = arith.addf %12, %15 : vector<1x256xf32>
    %c3_9 = arith.constant 3 : index
    %17 = memref.load %arg5[%c3_9] : memref<16xf32, #tpu.memory_space<smem>>
    %18 = vector.broadcast %17 : f32 to vector<1x256xf32>
    %19 = arith.mulf %18, %5 : vector<1x256xf32>
    %20 = arith.addf %16, %19 : vector<1x256xf32>
    %c0_10 = arith.constant 0 : index
    %21 = memref.load %arg3[%c0_10] : memref<8xf32, #tpu.memory_space<smem>>
    %22 = arith.addf %21, %0 : f32
    %23 = vector.broadcast %22 : f32 to vector<1x256xf32>
    %24 = arith.addf %20, %23 : vector<1x256xf32>
    %c0_11 = arith.constant 0 : index
    %25 = memref.load %arg4[%c0_11] : memref<8xf32, #tpu.memory_space<smem>>
    %26 = arith.addf %25, %0 : f32
    %27 = vector.broadcast %26 : f32 to vector<1x256xf32>
    %28 = arith.addf %20, %27 : vector<1x256xf32>
    %cst = arith.constant 1.000000e+00 : f32
    %29 = arith.subf %cst, %1 : f32
    %30 = vector.broadcast %29 : f32 to vector<1x256xf32>
    %31 = arith.mulf %30, %24 : vector<1x256xf32>
    %32 = vector.broadcast %1 : f32 to vector<1x256xf32>
    %33 = arith.mulf %32, %28 : vector<1x256xf32>
    %34 = arith.addf %31, %33 : vector<1x256xf32>
    %c0_12 = arith.constant 0 : index
    %c0_13 = arith.constant 0 : index
    %35 = vector.load %arg7[%c0_12, %c0_13] : memref<8x256xf32, #tpu.memory_space<vmem>>, vector<1x256xf32>
    tpu.vector_store %arg7[%c0_12, %c0_13], %34 {strides = array<i32>} : memref<8x256xf32, #tpu.memory_space<vmem>>, vector<1x256xf32>,
    %c4 = arith.constant 4 : index
    %36 = memref.load %arg5[%c4] : memref<16xf32, #tpu.memory_space<smem>>
    %37 = vector.broadcast %36 : f32 to vector<1x256xf32>
    %38 = arith.mulf %37, %2 : vector<1x256xf32>
    %c5 = arith.constant 5 : index
    %39 = memref.load %arg5[%c5] : memref<16xf32, #tpu.memory_space<smem>>
    %40 = vector.broadcast %39 : f32 to vector<1x256xf32>
    %41 = arith.mulf %40, %3 : vector<1x256xf32>
    %42 = arith.addf %38, %41 : vector<1x256xf32>
    %c6 = arith.constant 6 : index
    %43 = memref.load %arg5[%c6] : memref<16xf32, #tpu.memory_space<smem>>
    %44 = vector.broadcast %43 : f32 to vector<1x256xf32>
    %45 = arith.mulf %44, %4 : vector<1x256xf32>
    %46 = arith.addf %42, %45 : vector<1x256xf32>
    %c7 = arith.constant 7 : index
    %47 = memref.load %arg5[%c7] : memref<16xf32, #tpu.memory_space<smem>>
    %48 = vector.broadcast %47 : f32 to vector<1x256xf32>
    %49 = arith.mulf %48, %5 : vector<1x256xf32>
    %50 = arith.addf %46, %49 : vector<1x256xf32>
    %c1_14 = arith.constant 1 : index
    %51 = memref.load %arg3[%c1_14] : memref<8xf32, #tpu.memory_space<smem>>
    %52 = arith.addf %51, %0 : f32
    %53 = vector.broadcast %52 : f32 to vector<1x256xf32>
    %54 = arith.addf %50, %53 : vector<1x256xf32>
    %c1_15 = arith.constant 1 : index
    %55 = memref.load %arg4[%c1_15] : memref<8xf32, #tpu.memory_space<smem>>
    %56 = arith.addf %55, %0 : f32
    %57 = vector.broadcast %56 : f32 to vector<1x256xf32>
    %58 = arith.addf %50, %57 : vector<1x256xf32>
    %cst_16 = arith.constant 1.000000e+00 : f32
    %59 = arith.subf %cst_16, %1 : f32
    %60 = vector.broadcast %59 : f32 to vector<1x256xf32>
    %61 = arith.mulf %60, %54 : vector<1x256xf32>
    %62 = vector.broadcast %1 : f32 to vector<1x256xf32>
    %63 = arith.mulf %62, %58 : vector<1x256xf32>
    %64 = arith.addf %61, %63 : vector<1x256xf32>
    %c1_17 = arith.constant 1 : index
    %c0_18 = arith.constant 0 : index
    %65 = vector.load %arg7[%c1_17, %c0_18] : memref<8x256xf32, #tpu.memory_space<vmem>>, vector<1x256xf32>
    tpu.vector_store %arg7[%c1_17, %c0_18], %64 {strides = array<i32>} : memref<8x256xf32, #tpu.memory_space<vmem>>, vector<1x256xf32>,
    %c8 = arith.constant 8 : index
    %66 = memref.load %arg5[%c8] : memref<16xf32, #tpu.memory_space<smem>>
    %67 = vector.broadcast %66 : f32 to vector<1x256xf32>
    %68 = arith.mulf %67, %2 : vector<1x256xf32>
    %c9 = arith.constant 9 : index
    %69 = memref.load %arg5[%c9] : memref<16xf32, #tpu.memory_space<smem>>
    %70 = vector.broadcast %69 : f32 to vector<1x256xf32>
    %71 = arith.mulf %70, %3 : vector<1x256xf32>
    %72 = arith.addf %68, %71 : vector<1x256xf32>
    %c10 = arith.constant 10 : index
    %73 = memref.load %arg5[%c10] : memref<16xf32, #tpu.memory_space<smem>>
    %74 = vector.broadcast %73 : f32 to vector<1x256xf32>
    %75 = arith.mulf %74, %4 : vector<1x256xf32>
    %76 = arith.addf %72, %75 : vector<1x256xf32>
    %c11 = arith.constant 11 : index
    %77 = memref.load %arg5[%c11] : memref<16xf32, #tpu.memory_space<smem>>
    %78 = vector.broadcast %77 : f32 to vector<1x256xf32>
    %79 = arith.mulf %78, %5 : vector<1x256xf32>
    %80 = arith.addf %76, %79 : vector<1x256xf32>
    %c2_19 = arith.constant 2 : index
    %81 = memref.load %arg3[%c2_19] : memref<8xf32, #tpu.memory_space<smem>>
    %82 = arith.addf %81, %0 : f32
    %83 = vector.broadcast %82 : f32 to vector<1x256xf32>
    %84 = arith.addf %80, %83 : vector<1x256xf32>
    %c2_20 = arith.constant 2 : index
    %85 = memref.load %arg4[%c2_20] : memref<8xf32, #tpu.memory_space<smem>>
    %86 = arith.addf %85, %0 : f32
    %87 = vector.broadcast %86 : f32 to vector<1x256xf32>
    %88 = arith.addf %80, %87 : vector<1x256xf32>
    %cst_21 = arith.constant 1.000000e+00 : f32
    %89 = arith.subf %cst_21, %1 : f32
    %90 = vector.broadcast %89 : f32 to vector<1x256xf32>
    %91 = arith.mulf %90, %84 : vector<1x256xf32>
    %92 = vector.broadcast %1 : f32 to vector<1x256xf32>
    %93 = arith.mulf %92, %88 : vector<1x256xf32>
    %94 = arith.addf %91, %93 : vector<1x256xf32>
    %c2_22 = arith.constant 2 : index
    %c0_23 = arith.constant 0 : index
    %95 = vector.load %arg7[%c2_22, %c0_23] : memref<8x256xf32, #tpu.memory_space<vmem>>, vector<1x256xf32>
    tpu.vector_store %arg7[%c2_22, %c0_23], %94 {strides = array<i32>} : memref<8x256xf32, #tpu.memory_space<vmem>>, vector<1x256xf32>,
    %c12 = arith.constant 12 : index
    %96 = memref.load %arg5[%c12] : memref<16xf32, #tpu.memory_space<smem>>
    %97 = vector.broadcast %96 : f32 to vector<1x256xf32>
    %98 = arith.mulf %97, %2 : vector<1x256xf32>
    %c13 = arith.constant 13 : index
    %99 = memref.load %arg5[%c13] : memref<16xf32, #tpu.memory_space<smem>>
    %100 = vector.broadcast %99 : f32 to vector<1x256xf32>
    %101 = arith.mulf %100, %3 : vector<1x256xf32>
    %102 = arith.addf %98, %101 : vector<1x256xf32>
    %c14 = arith.constant 14 : index
    %103 = memref.load %arg5[%c14] : memref<16xf32, #tpu.memory_space<smem>>
    %104 = vector.broadcast %103 : f32 to vector<1x256xf32>
    %105 = arith.mulf %104, %4 : vector<1x256xf32>
    %106 = arith.addf %102, %105 : vector<1x256xf32>
    %c15 = arith.constant 15 : index
    %107 = memref.load %arg5[%c15] : memref<16xf32, #tpu.memory_space<smem>>
    %108 = vector.broadcast %107 : f32 to vector<1x256xf32>
    %109 = arith.mulf %108, %5 : vector<1x256xf32>
    %110 = arith.addf %106, %109 : vector<1x256xf32>
    %c3_24 = arith.constant 3 : index
    %111 = memref.load %arg3[%c3_24] : memref<8xf32, #tpu.memory_space<smem>>
    %112 = arith.addf %111, %0 : f32
    %113 = vector.broadcast %112 : f32 to vector<1x256xf32>
    %114 = arith.addf %110, %113 : vector<1x256xf32>
    %c3_25 = arith.constant 3 : index
    %115 = memref.load %arg4[%c3_25] : memref<8xf32, #tpu.memory_space<smem>>
    %116 = arith.addf %115, %0 : f32
    %117 = vector.broadcast %116 : f32 to vector<1x256xf32>
    %118 = arith.addf %110, %117 : vector<1x256xf32>
    %cst_26 = arith.constant 1.000000e+00 : f32
    %119 = arith.subf %cst_26, %1 : f32
    %120 = vector.broadcast %119 : f32 to vector<1x256xf32>
    %121 = arith.mulf %120, %114 : vector<1x256xf32>
    %122 = vector.broadcast %1 : f32 to vector<1x256xf32>
    %123 = arith.mulf %122, %118 : vector<1x256xf32>
    %124 = arith.addf %121, %123 : vector<1x256xf32>
    %c3_27 = arith.constant 3 : index
    %c0_28 = arith.constant 0 : index
    %125 = vector.load %arg7[%c3_27, %c0_28] : memref<8x256xf32, #tpu.memory_space<vmem>>, vector<1x256xf32>
    tpu.vector_store %arg7[%c3_27, %c0_28], %124 {strides = array<i32>} : memref<8x256xf32, #tpu.memory_space<vmem>>, vector<1x256xf32>,
    %c1_29 = arith.constant 1 : index
    %126 = memref.load %arg1[%c1_29] : memref<2xf32, #tpu.memory_space<smem>>
    %c1_30 = arith.constant 1 : index
    %127 = memref.load %arg2[%c1_30] : memref<2xf32, #tpu.memory_space<smem>>
    %c4_31 = arith.constant 4 : index
    %c0_32 = arith.constant 0 : index
    %128 = vector.load %arg6[%c4_31, %c0_32] : memref<8x256xf32, #tpu.memory_space<vmem>>, vector<1x256xf32>
    %c5_33 = arith.constant 5 : index
    %c0_34 = arith.constant 0 : index
    %129 = vector.load %arg6[%c5_33, %c0_34] : memref<8x256xf32, #tpu.memory_space<vmem>>, vector<1x256xf32>
    %c6_35 = arith.constant 6 : index
    %c0_36 = arith.constant 0 : index
    %130 = vector.load %arg6[%c6_35, %c0_36] : memref<8x256xf32, #tpu.memory_space<vmem>>, vector<1x256xf32>
    %c7_37 = arith.constant 7 : index
    %c0_38 = arith.constant 0 : index
    %131 = vector.load %arg6[%c7_37, %c0_38] : memref<8x256xf32, #tpu.memory_space<vmem>>, vector<1x256xf32>
    %c0_39 = arith.constant 0 : index
    %132 = memref.load %arg5[%c0_39] : memref<16xf32, #tpu.memory_space<smem>>
    %133 = vector.broadcast %132 : f32 to vector<1x256xf32>
    %134 = arith.mulf %133, %128 : vector<1x256xf32>
    %c1_40 = arith.constant 1 : index
    %135 = memref.load %arg5[%c1_40] : memref<16xf32, #tpu.memory_space<smem>>
    %136 = vector.broadcast %135 : f32 to vector<1x256xf32>
    %137 = arith.mulf %136, %129 : vector<1x256xf32>
    %138 = arith.addf %134, %137 : vector<1x256xf32>
    %c2_41 = arith.constant 2 : index
    %139 = memref.load %arg5[%c2_41] : memref<16xf32, #tpu.memory_space<smem>>
    %140 = vector.broadcast %139 : f32 to vector<1x256xf32>
    %141 = arith.mulf %140, %130 : vector<1x256xf32>
    %142 = arith.addf %138, %141 : vector<1x256xf32>
    %c3_42 = arith.constant 3 : index
    %143 = memref.load %arg5[%c3_42] : memref<16xf32, #tpu.memory_space<smem>>
    %144 = vector.broadcast %143 : f32 to vector<1x256xf32>
    %145 = arith.mulf %144, %131 : vector<1x256xf32>
    %146 = arith.addf %142, %145 : vector<1x256xf32>
    %c4_43 = arith.constant 4 : index
    %147 = memref.load %arg3[%c4_43] : memref<8xf32, #tpu.memory_space<smem>>
    %148 = arith.addf %147, %126 : f32
    %149 = vector.broadcast %148 : f32 to vector<1x256xf32>
    %150 = arith.addf %146, %149 : vector<1x256xf32>
    %c4_44 = arith.constant 4 : index
    %151 = memref.load %arg4[%c4_44] : memref<8xf32, #tpu.memory_space<smem>>
    %152 = arith.addf %151, %126 : f32
    %153 = vector.broadcast %152 : f32 to vector<1x256xf32>
    %154 = arith.addf %146, %153 : vector<1x256xf32>
    %cst_45 = arith.constant 1.000000e+00 : f32
    %155 = arith.subf %cst_45, %127 : f32
    %156 = vector.broadcast %155 : f32 to vector<1x256xf32>
    %157 = arith.mulf %156, %150 : vector<1x256xf32>
    %158 = vector.broadcast %127 : f32 to vector<1x256xf32>
    %159 = arith.mulf %158, %154 : vector<1x256xf32>
    %160 = arith.addf %157, %159 : vector<1x256xf32>
    %c4_46 = arith.constant 4 : index
    %c0_47 = arith.constant 0 : index
    %161 = vector.load %arg7[%c4_46, %c0_47] : memref<8x256xf32, #tpu.memory_space<vmem>>, vector<1x256xf32>
    tpu.vector_store %arg7[%c4_46, %c0_47], %160 {strides = array<i32>} : memref<8x256xf32, #tpu.memory_space<vmem>>, vector<1x256xf32>,
    %c4_48 = arith.constant 4 : index
    %162 = memref.load %arg5[%c4_48] : memref<16xf32, #tpu.memory_space<smem>>
    %163 = vector.broadcast %162 : f32 to vector<1x256xf32>
    %164 = arith.mulf %163, %128 : vector<1x256xf32>
    %c5_49 = arith.constant 5 : index
    %165 = memref.load %arg5[%c5_49] : memref<16xf32, #tpu.memory_space<smem>>
    %166 = vector.broadcast %165 : f32 to vector<1x256xf32>
    %167 = arith.mulf %166, %129 : vector<1x256xf32>
    %168 = arith.addf %164, %167 : vector<1x256xf32>
    %c6_50 = arith.constant 6 : index
    %169 = memref.load %arg5[%c6_50] : memref<16xf32, #tpu.memory_space<smem>>
    %170 = vector.broadcast %169 : f32 to vector<1x256xf32>
    %171 = arith.mulf %170, %130 : vector<1x256xf32>
    %172 = arith.addf %168, %171 : vector<1x256xf32>
    %c7_51 = arith.constant 7 : index
    %173 = memref.load %arg5[%c7_51] : memref<16xf32, #tpu.memory_space<smem>>
    %174 = vector.broadcast %173 : f32 to vector<1x256xf32>
    %175 = arith.mulf %174, %131 : vector<1x256xf32>
    %176 = arith.addf %172, %175 : vector<1x256xf32>
    %c5_52 = arith.constant 5 : index
    %177 = memref.load %arg3[%c5_52] : memref<8xf32, #tpu.memory_space<smem>>
    %178 = arith.addf %177, %126 : f32
    %179 = vector.broadcast %178 : f32 to vector<1x256xf32>
    %180 = arith.addf %176, %179 : vector<1x256xf32>
    %c5_53 = arith.constant 5 : index
    %181 = memref.load %arg4[%c5_53] : memref<8xf32, #tpu.memory_space<smem>>
    %182 = arith.addf %181, %126 : f32
    %183 = vector.broadcast %182 : f32 to vector<1x256xf32>
    %184 = arith.addf %176, %183 : vector<1x256xf32>
    %cst_54 = arith.constant 1.000000e+00 : f32
    %185 = arith.subf %cst_54, %127 : f32
    %186 = vector.broadcast %185 : f32 to vector<1x256xf32>
    %187 = arith.mulf %186, %180 : vector<1x256xf32>
    %188 = vector.broadcast %127 : f32 to vector<1x256xf32>
    %189 = arith.mulf %188, %184 : vector<1x256xf32>
    %190 = arith.addf %187, %189 : vector<1x256xf32>
    %c5_55 = arith.constant 5 : index
    %c0_56 = arith.constant 0 : index
    %191 = vector.load %arg7[%c5_55, %c0_56] : memref<8x256xf32, #tpu.memory_space<vmem>>, vector<1x256xf32>
    tpu.vector_store %arg7[%c5_55, %c0_56], %190 {strides = array<i32>} : memref<8x256xf32, #tpu.memory_space<vmem>>, vector<1x256xf32>,
    %c8_57 = arith.constant 8 : index
    %192 = memref.load %arg5[%c8_57] : memref<16xf32, #tpu.memory_space<smem>>
    %193 = vector.broadcast %192 : f32 to vector<1x256xf32>
    %194 = arith.mulf %193, %128 : vector<1x256xf32>
    %c9_58 = arith.constant 9 : index
    %195 = memref.load %arg5[%c9_58] : memref<16xf32, #tpu.memory_space<smem>>
    %196 = vector.broadcast %195 : f32 to vector<1x256xf32>
    %197 = arith.mulf %196, %129 : vector<1x256xf32>
    %198 = arith.addf %194, %197 : vector<1x256xf32>
    %c10_59 = arith.constant 10 : index
    %199 = memref.load %arg5[%c10_59] : memref<16xf32, #tpu.memory_space<smem>>
    %200 = vector.broadcast %199 : f32 to vector<1x256xf32>
    %201 = arith.mulf %200, %130 : vector<1x256xf32>
    %202 = arith.addf %198, %201 : vector<1x256xf32>
    %c11_60 = arith.constant 11 : index
    %203 = memref.load %arg5[%c11_60] : memref<16xf32, #tpu.memory_space<smem>>
    %204 = vector.broadcast %203 : f32 to vector<1x256xf32>
    %205 = arith.mulf %204, %131 : vector<1x256xf32>
    %206 = arith.addf %202, %205 : vector<1x256xf32>
    %c6_61 = arith.constant 6 : index
    %207 = memref.load %arg3[%c6_61] : memref<8xf32, #tpu.memory_space<smem>>
    %208 = arith.addf %207, %126 : f32
    %209 = vector.broadcast %208 : f32 to vector<1x256xf32>
    %210 = arith.addf %206, %209 : vector<1x256xf32>
    %c6_62 = arith.constant 6 : index
    %211 = memref.load %arg4[%c6_62] : memref<8xf32, #tpu.memory_space<smem>>
    %212 = arith.addf %211, %126 : f32
    %213 = vector.broadcast %212 : f32 to vector<1x256xf32>
    %214 = arith.addf %206, %213 : vector<1x256xf32>
    %cst_63 = arith.constant 1.000000e+00 : f32
    %215 = arith.subf %cst_63, %127 : f32
    %216 = vector.broadcast %215 : f32 to vector<1x256xf32>
    %217 = arith.mulf %216, %210 : vector<1x256xf32>
    %218 = vector.broadcast %127 : f32 to vector<1x256xf32>
    %219 = arith.mulf %218, %214 : vector<1x256xf32>
    %220 = arith.addf %217, %219 : vector<1x256xf32>
    %c6_64 = arith.constant 6 : index
    %c0_65 = arith.constant 0 : index
    %221 = vector.load %arg7[%c6_64, %c0_65] : memref<8x256xf32, #tpu.memory_space<vmem>>, vector<1x256xf32>
    tpu.vector_store %arg7[%c6_64, %c0_65], %220 {strides = array<i32>} : memref<8x256xf32, #tpu.memory_space<vmem>>, vector<1x256xf32>,
    %c12_66 = arith.constant 12 : index
    %222 = memref.load %arg5[%c12_66] : memref<16xf32, #tpu.memory_space<smem>>
    %223 = vector.broadcast %222 : f32 to vector<1x256xf32>
    %224 = arith.mulf %223, %128 : vector<1x256xf32>
    %c13_67 = arith.constant 13 : index
    %225 = memref.load %arg5[%c13_67] : memref<16xf32, #tpu.memory_space<smem>>
    %226 = vector.broadcast %225 : f32 to vector<1x256xf32>
    %227 = arith.mulf %226, %129 : vector<1x256xf32>
    %228 = arith.addf %224, %227 : vector<1x256xf32>
    %c14_68 = arith.constant 14 : index
    %229 = memref.load %arg5[%c14_68] : memref<16xf32, #tpu.memory_space<smem>>
    %230 = vector.broadcast %229 : f32 to vector<1x256xf32>
    %231 = arith.mulf %230, %130 : vector<1x256xf32>
    %232 = arith.addf %228, %231 : vector<1x256xf32>
    %c15_69 = arith.constant 15 : index
    %233 = memref.load %arg5[%c15_69] : memref<16xf32, #tpu.memory_space<smem>>
    %234 = vector.broadcast %233 : f32 to vector<1x256xf32>
    %235 = arith.mulf %234, %131 : vector<1x256xf32>
    %236 = arith.addf %232, %235 : vector<1x256xf32>
    %c7_70 = arith.constant 7 : index
    %237 = memref.load %arg3[%c7_70] : memref<8xf32, #tpu.memory_space<smem>>
    %238 = arith.addf %237, %126 : f32
    %239 = vector.broadcast %238 : f32 to vector<1x256xf32>
    %240 = arith.addf %236, %239 : vector<1x256xf32>
    %c7_71 = arith.constant 7 : index
    %241 = memref.load %arg4[%c7_71] : memref<8xf32, #tpu.memory_space<smem>>
    %242 = arith.addf %241, %126 : f32
    %243 = vector.broadcast %242 : f32 to vector<1x256xf32>
    %244 = arith.addf %236, %243 : vector<1x256xf32>
    %cst_72 = arith.constant 1.000000e+00 : f32
    %245 = arith.subf %cst_72, %127 : f32
    %246 = vector.broadcast %245 : f32 to vector<1x256xf32>
    %247 = arith.mulf %246, %240 : vector<1x256xf32>
    %248 = vector.broadcast %127 : f32 to vector<1x256xf32>
    %249 = arith.mulf %248, %244 : vector<1x256xf32>
    %250 = arith.addf %247, %249 : vector<1x256xf32>
    %c7_73 = arith.constant 7 : index
    %c0_74 = arith.constant 0 : index
    %251 = vector.load %arg7[%c7_73, %c0_74] : memref<8x256xf32, #tpu.memory_space<vmem>>, vector<1x256xf32>
    tpu.vector_store %arg7[%c7_73, %c0_74], %250 {strides = array<i32>} : memref<8x256xf32, #tpu.memory_space<vmem>>, vector<1x256xf32>,
    return
  }
  func.func @transform_0(%arg0: i32) -> i32 {
    %c0_i32 = arith.constant 0 : i32
    %c0_i32_0 = arith.constant 0 : i32
    return %c0_i32 : i32
  }
  func.func @transform_1(%arg0: i32) -> i32 {
    %c0_i32 = arith.constant 0 : i32
    %c0_i32_0 = arith.constant 0 : i32
    return %c0_i32 : i32
  }
  func.func @transform_2(%arg0: i32) -> i32 {
    %c0_i32 = arith.constant 0 : i32
    %c0_i32_0 = arith.constant 0 : i32
    return %c0_i32 : i32
  }
  func.func @transform_3(%arg0: i32) -> i32 {
    %c0_i32 = arith.constant 0 : i32
    %c0_i32_0 = arith.constant 0 : i32
    return %c0_i32 : i32
  }
  func.func @transform_4(%arg0: i32) -> i32 {
    %c0_i32 = arith.constant 0 : i32
    %c0_i32_0 = arith.constant 0 : i32
    return %c0_i32 : i32
  }
  func.func @transform_5(%arg0: i32) -> (i32, i32) {
    %c0_i32 = arith.constant 0 : i32
    %c0_i32_0 = arith.constant 0 : i32
    return %c0_i32, %arg0 : i32, i32
  }
  func.func @transform_6(%arg0: i32) -> (i32, i32) {
    %c0_i32 = arith.constant 0 : i32
    %c0_i32_0 = arith.constant 0 : i32
    return %c0_i32, %arg0 : i32, i32
  }
}

</mosaic_0001>

<llo_original>
// kernel: tpu_custom_call.1
$region0: #{tpu_custom_call.1}
  #allocation0 [shape = 'u32[]', space=smem, size = 0x4, offset = 0x4, fixed_abs, tag = 'smem constant byte address 0x4 - core index']
  #allocation1 [shape = 'u32[144,128]{1,0:T(1,128)}', space=vmem, size = 0x12000, scoped, tag = 'internal scratch']
  %s0 = inlined_call_operand.hbm [shape: f32[2], index: 0, kind: input, shape index: {}]
  %s1 = inlined_call_operand.vmem [shape: f32[2], index: 1, kind: input, shape index: {}]
  %s2 = inlined_call_operand.vmem [shape: f32[8], index: 2, kind: input, shape index: {}]
  %s3 = inlined_call_operand.vmem [shape: f32[8], index: 3, kind: input, shape index: {}]
  %s4 = inlined_call_operand.vmem [shape: f32[16], index: 4, kind: input, shape index: {}]
  %s5 = inlined_call_operand.hbm [shape: f32[8,256], index: 5, kind: input, shape index: {}]
  %s6 = inlined_call_operand.hbm [shape: f32[8,256], index: 6, kind: output, shape index: {}]
  %s7 = sld [smem:[#allocation0]]
  $region58: #{tpu_custom_call.1} parent=0
    _
  %s9 = ssub.s32 1, %s7
  %s10 = scalar_select 0, %s9, %s7
  $region1: #{tpu_custom_call.1} parent=0
    #allocation2 [shape = 'u8[512]{0}', space=smem, size = 0x200, scoped, tag = 'input window, operand 0, single buffered']
    #allocation3 [shape = 's32[1]{0}', space=sflag, size = 0x4, scoped, tag = 'scoped memory for tpu_custom_call.1']
    #allocation4 [shape = 's32[1]{0}', space=sflag, size = 0x4, scoped, tag = 'scoped memory for tpu_custom_call.1']
    #allocation5 [shape = 's32[1]{0}', space=sflag, size = 0x4, scoped, tag = 'scoped memory for tpu_custom_call.1']
    #allocation6 [shape = 's32[1]{0}', space=sflag, size = 0x4, scoped, tag = 'scoped memory for tpu_custom_call.1']
    #allocation7 [shape = 'u8[512]{0}', space=smem, size = 0x200, scoped, tag = 'input window, operand 1, single buffered']
    #allocation8 [shape = 'u8[512]{0}', space=smem, size = 0x200, scoped, tag = 'input window, operand 2, single buffered']
    #allocation9 [shape = 's32[1]{0}', space=sflag, size = 0x4, scoped, tag = 'scoped memory for tpu_custom_call.1']
    #allocation10 [shape = 'u8[512]{0}', space=smem, size = 0x200, scoped, tag = 'input window, operand 3, single buffered']
    #allocation11 [shape = 'u8[512]{0}', space=smem, size = 0x200, scoped, tag = 'input window, operand 4, single buffered']
    #allocation12 [shape = 's32[1]{0}', space=sflag, size = 0x4, scoped, tag = 'scoped memory for tpu_custom_call.1']
    #allocation13 [shape = 'u8[8192]{0}', space=vmem, size = 0x2000, scoped, tag = 'input window, operand 5, single buffered']
    #allocation14 [shape = 'u8[8192]{0}', space=vmem, size = 0x2000, scoped, tag = 'output window, operand 0, single buffered']
    %11 = vsyncpa [#allocation5], 0
    %12 = vsyncpa [#allocation6], 0
    %13 = vsyncpa [#allocation9], 0
    %14 = vsyncpa [#allocation12], 0
    %15 = vsyncpa [#allocation3], 0
    %16 = vsyncpa [#allocation4], 0
    // Predicated region
    $region2: #{tpu_custom_call.1} parent=1 // pred_check
      _
    $region3: #{tpu_custom_call.1} parent=1 // pred_check_branch
      %18 = sbr.rel (0) target = $region5
    $region4: #{tpu_custom_call.1} parent=1 // pred_region
      %s20 = ssub.s32 16, 16
      %21 = vsyncadd [#allocation5], %s20
      %24 = dma.hbm_to_smem %s0, 16, [#allocation2], [#allocation5]
    $region5: #{tpu_custom_call.1} parent=1 // pred_fallthru
      _
    // Predicated region
    $region6: #{tpu_custom_call.1} parent=1 // pred_check
      _
    $region7: #{tpu_custom_call.1} parent=1 // pred_check_branch
      %26 = sbr.rel (0) target = $region9
    $region8: #{tpu_custom_call.1} parent=1 // pred_region
      %s28 = ssub.s32 16, 16
      %29 = vsyncadd [#allocation6], %s28
      %s31 = sshll.u32 %s1, 4
      %s32 = int_to_ptr.vmem [resolvable:$true] %s31
      %34 = dma.vmem_to_smem %s32, 16, [#allocation7], [#allocation6]
    $region9: #{tpu_custom_call.1} parent=1 // pred_fallthru
      _
    // Predicated region
    $region10: #{tpu_custom_call.1} parent=1 // pred_check
      _
    $region11: #{tpu_custom_call.1} parent=1 // pred_check_branch
      %36 = sbr.rel (0) target = $region13
    $region12: #{tpu_custom_call.1} parent=1 // pred_region
      %s38 = ssub.s32 16, 16
      %39 = vsyncadd [#allocation9], %s38
      %s41 = sshll.u32 %s2, 4
      %s42 = int_to_ptr.vmem [resolvable:$true] %s41
      %44 = dma.vmem_to_smem %s42, 16, [#allocation8], [#allocation9]
    $region13: #{tpu_custom_call.1} parent=1 // pred_fallthru
      _
    // Predicated region
    $region14: #{tpu_custom_call.1} parent=1 // pred_check
      _
    $region15: #{tpu_custom_call.1} parent=1 // pred_check_branch
      %46 = sbr.rel (0) target = $region17
    $region16: #{tpu_custom_call.1} parent=1 // pred_region
      %s48 = ssub.s32 16, 16
      %49 = vsyncadd [#allocation9], %s48
      %s51 = sshll.u32 %s3, 4
      %s52 = int_to_ptr.vmem [resolvable:$true] %s51
      %54 = dma.vmem_to_smem %s52, 16, [#allocation10], [#allocation9]
    $region17: #{tpu_custom_call.1} parent=1 // pred_fallthru
      _
    // Predicated region
    $region18: #{tpu_custom_call.1} parent=1 // pred_check
      _
    $region19: #{tpu_custom_call.1} parent=1 // pred_check_branch
      %56 = sbr.rel (0) target = $region21
    $region20: #{tpu_custom_call.1} parent=1 // pred_region
      %s58 = ssub.s32 16, 16
      %59 = vsyncadd [#allocation12], %s58
      %s61 = sshll.u32 %s4, 4
      %s62 = int_to_ptr.vmem [resolvable:$true] %s61
      %64 = dma.vmem_to_smem %s62, 16, [#allocation11], [#allocation12]
    $region21: #{tpu_custom_call.1} parent=1 // pred_fallthru
      _
    // Predicated region
    $region22: #{tpu_custom_call.1} parent=1 // pred_check
      _
    $region23: #{tpu_custom_call.1} parent=1 // pred_check_branch
      %66 = sbr.rel (0) target = $region25
    $region24: #{tpu_custom_call.1} parent=1 // pred_region
      %s68 = ssub.s32 256, 256
      %69 = vsyncadd [#allocation3], %s68
      %s71 = sshll.u32 [#allocation13], 4
      %s72 = int_to_ptr.vmem [resolvable:$true] %s71
      %74 = dma.hbm_to_vmem [thread:$0]  %s5, 256, %s72, [#allocation3]
    $region25: #{tpu_custom_call.1} parent=1 // pred_fallthru
      _
    // Predicated region
    $region26: #{tpu_custom_call.1} parent=1 // pred_check
      _
    $region27: #{tpu_custom_call.1} parent=1 // pred_check_branch
      %76 = sbr.rel (0) target = $region29
    $region28: #{tpu_custom_call.1} parent=1 // pred_region
      %77 = dma.done [#allocation5], 16
    $region29: #{tpu_custom_call.1} parent=1 // pred_fallthru
      _
    // Predicated region
    $region30: #{tpu_custom_call.1} parent=1 // pred_check
      _
    $region31: #{tpu_custom_call.1} parent=1 // pred_check_branch
      %79 = sbr.rel (0) target = $region33
    $region32: #{tpu_custom_call.1} parent=1 // pred_region
      %80 = dma.done [#allocation6], 16
    $region33: #{tpu_custom_call.1} parent=1 // pred_fallthru
      _
    // Predicated region
    $region34: #{tpu_custom_call.1} parent=1 // pred_check
      _
    $region35: #{tpu_custom_call.1} parent=1 // pred_check_branch
      %82 = sbr.rel (0) target = $region37
    $region36: #{tpu_custom_call.1} parent=1 // pred_region
      %83 = dma.done [#allocation9], 16
    $region37: #{tpu_custom_call.1} parent=1 // pred_fallthru
      _
    // Predicated region
    $region38: #{tpu_custom_call.1} parent=1 // pred_check
      _
    $region39: #{tpu_custom_call.1} parent=1 // pred_check_branch
      %85 = sbr.rel (0) target = $region41
    $region40: #{tpu_custom_call.1} parent=1 // pred_region
      %86 = dma.done [#allocation9], 16
    $region41: #{tpu_custom_call.1} parent=1 // pred_fallthru
      _
    // Predicated region
    $region42: #{tpu_custom_call.1} parent=1 // pred_check
      _
    $region43: #{tpu_custom_call.1} parent=1 // pred_check_branch
      %88 = sbr.rel (0) target = $region45
    $region44: #{tpu_custom_call.1} parent=1 // pred_region
      %89 = dma.done [#allocation12], 16
    $region45: #{tpu_custom_call.1} parent=1 // pred_fallthru
      _
    // Predicated region
    $region46: #{tpu_custom_call.1} parent=1 // pred_check
      _
    $region47: #{tpu_custom_call.1} parent=1 // pred_check_branch
      %91 = sbr.rel (0) target = $region49
    $region48: #{tpu_custom_call.1} parent=1 // pred_region
      %92 = dma.done [#allocation3], 256
    $region49: #{tpu_custom_call.1} parent=1 // pred_fallthru
      _
    %93 = sfence
    %s94 = sld [smem:[#allocation2]]
    %s95 = sld [smem:[#allocation7]]
    %v96 = vld [vmem:[#allocation13] ss:$8 sm:$0x3]
    %s97 = scalar_lea.vmem [#allocation13], 1
    %v98 = vld [vmem:[%s97] ss:$8 sm:$0x3]
    %s99 = scalar_lea.vmem [#allocation13], 2
    %v100 = vld [vmem:[%s99] ss:$8 sm:$0x3]
    %s101 = scalar_lea.vmem [#allocation13], 3
    %v102 = vld [vmem:[%s101] ss:$8 sm:$0x3]
    %s103 = sld [smem:[#allocation11]]
    %v104 = vstv %s103
    %v105 = vmul.f32 %v104, %v96
    %s106 = sld [smem:[#allocation11 + $0x1]]
    %v107 = vstv %s106
    %v108 = vmul.f32 %v107, %v98
    %v109 = vadd.f32 %v105, %v108
    %s110 = sld [smem:[#allocation11 + $0x2]]
    %v111 = vstv %s110
    %v112 = vmul.f32 %v111, %v100
    %v113 = vadd.f32 %v109, %v112
    %s114 = sld [smem:[#allocation11 + $0x3]]
    %v115 = vstv %s114
    %v116 = vmul.f32 %v115, %v102
    %v117 = vadd.f32 %v113, %v116
    %s118 = sld [smem:[#allocation8]]
    %s119 = sadd.f32 %s118, %s94
    %v120 = vstv %s119
    %v121 = vadd.f32 %v117, %v120
    %s122 = sld [smem:[#allocation10]]
    %s123 = sadd.f32 %s122, %s94
    %v124 = vstv %s123
    %v125 = vadd.f32 %v117, %v124
    %s126 = ssub.f32 1.0, %s95
    %v127 = vstv %s126
    %v128 = vmul.f32 %v127, %v121
    %v129 = vstv %s95
    %v130 = vmul.f32 %v129, %v125
    %v131 = vadd.f32 %v128, %v130
    %v132 = vlaneseq
    %vm133 = vcmp.ge.s32.totalorder %v132, 0
    %vm134 = vcmp.lt.s32.totalorder %v132, 256
    %vm135 = vmand %vm133, %vm134
    %136 = vst.msk [vmem:[#allocation14] ss:$8 sm:$0x3] %vm135, %v131
    %137 = vst.msk [vmem:[#allocation14] ss:$8 sm:$0x0] %vm135, %v131
    %s138 = sld [smem:[#allocation11 + $0x4]]
    %v139 = vstv %s138
    %v140 = vmul.f32 %v139, %v96
    %s141 = sld [smem:[#allocation11 + $0x5]]
    %v142 = vstv %s141
    %v143 = vmul.f32 %v142, %v98
    %v144 = vadd.f32 %v140, %v143
    %s145 = sld [smem:[#allocation11 + $0x6]]
    %v146 = vstv %s145
    %v147 = vmul.f32 %v146, %v100
    %v148 = vadd.f32 %v144, %v147
    %s149 = sld [smem:[#allocation11 + $0x7]]
    %v150 = vstv %s149
    %v151 = vmul.f32 %v150, %v102
    %v152 = vadd.f32 %v148, %v151
    %s153 = sld [smem:[#allocation8 + $0x1]]
    %s154 = sadd.f32 %s153, %s94
    %v155 = vstv %s154
    %v156 = vadd.f32 %v152, %v155
    %s157 = sld [smem:[#allocation10 + $0x1]]
    %s158 = sadd.f32 %s157, %s94
    %v159 = vstv %s158
    %v160 = vadd.f32 %v152, %v159
    %v161 = vmul.f32 %v127, %v156
    %v162 = vmul.f32 %v129, %v160
    %v163 = vadd.f32 %v161, %v162
    %s164 = scalar_lea.vmem [#allocation14], 1
    %165 = vst.msk [vmem:[%s164] ss:$8 sm:$0x3] %vm135, %v163
    %166 = vst.msk [vmem:[%s164] ss:$8 sm:$0x0] %vm135, %v163
    %s167 = sld [smem:[#allocation11 + $0x8]]
    %v168 = vstv %s167
    %v169 = vmul.f32 %v168, %v96
    %s170 = sld [smem:[#allocation11 + $0x9]]
    %v171 = vstv %s170
    %v172 = vmul.f32 %v171, %v98
    %v173 = vadd.f32 %v169, %v172
    %s174 = sld [smem:[#allocation11 + $0xa]]
    %v175 = vstv %s174
    %v176 = vmul.f32 %v175, %v100
    %v177 = vadd.f32 %v173, %v176
    %s178 = sld [smem:[#allocation11 + $0xb]]
    %v179 = vstv %s178
    %v180 = vmul.f32 %v179, %v102
    %v181 = vadd.f32 %v177, %v180
    %s182 = sld [smem:[#allocation8 + $0x2]]
    %s183 = sadd.f32 %s182, %s94
    %v184 = vstv %s183
    %v185 = vadd.f32 %v181, %v184
    %s186 = sld [smem:[#allocation10 + $0x2]]
    %s187 = sadd.f32 %s186, %s94
    %v188 = vstv %s187
    %v189 = vadd.f32 %v181, %v188
    %v190 = vmul.f32 %v127, %v185
    %v191 = vmul.f32 %v129, %v189
    %v192 = vadd.f32 %v190, %v191
    %s193 = scalar_lea.vmem [#allocation14], 2
    %194 = vst.msk [vmem:[%s193] ss:$8 sm:$0x3] %vm135, %v192
    %195 = vst.msk [vmem:[%s193] ss:$8 sm:$0x0] %vm135, %v192
    %s196 = sld [smem:[#allocation11 + $0xc]]
    %v197 = vstv %s196
    %v198 = vmul.f32 %v197, %v96
    %s199 = sld [smem:[#allocation11 + $0xd]]
    %v200 = vstv %s199
    %v201 = vmul.f32 %v200, %v98
    %v202 = vadd.f32 %v198, %v201
    %s203 = sld [smem:[#allocation11 + $0xe]]
    %v204 = vstv %s203
    %v205 = vmul.f32 %v204, %v100
    %v206 = vadd.f32 %v202, %v205
    %s207 = sld [smem:[#allocation11 + $0xf]]
    %v208 = vstv %s207
    %v209 = vmul.f32 %v208, %v102
    %v210 = vadd.f32 %v206, %v209
    %s211 = sld [smem:[#allocation8 + $0x3]]
    %s212 = sadd.f32 %s211, %s94
    %v213 = vstv %s212
    %v214 = vadd.f32 %v210, %v213
    %s215 = sld [smem:[#allocation10 + $0x3]]
    %s216 = sadd.f32 %s215, %s94
    %v217 = vstv %s216
    %v218 = vadd.f32 %v210, %v217
    %v219 = vmul.f32 %v127, %v214
    %v220 = vmul.f32 %v129, %v218
    %v221 = vadd.f32 %v219, %v220
    %s222 = scalar_lea.vmem [#allocation14], 3
    %223 = vst.msk [vmem:[%s222] ss:$8 sm:$0x3] %vm135, %v221
    %224 = vst.msk [vmem:[%s222] ss:$8 sm:$0x0] %vm135, %v221
    %s225 = sld [smem:[#allocation2 + $0x1]]
    %s226 = sld [smem:[#allocation7 + $0x1]]
    %s227 = scalar_lea.vmem [#allocation13], 4
    %v228 = vld [vmem:[%s227] ss:$8 sm:$0x3]
    %s229 = scalar_lea.vmem [#allocation13], 5
    %v230 = vld [vmem:[%s229] ss:$8 sm:$0x3]
    %s231 = scalar_lea.vmem [#allocation13], 6
    %v232 = vld [vmem:[%s231] ss:$8 sm:$0x3]
    %s233 = scalar_lea.vmem [#allocation13], 7
    %v234 = vld [vmem:[%s233] ss:$8 sm:$0x3]
    %s235 = sld [smem:[#allocation11]]
    %v236 = vstv %s235
    %v237 = vmul.f32 %v236, %v228
    %s238 = sld [smem:[#allocation11 + $0x1]]
    %v239 = vstv %s238
    %v240 = vmul.f32 %v239, %v230
    %v241 = vadd.f32 %v237, %v240
    %s242 = sld [smem:[#allocation11 + $0x2]]
    %v243 = vstv %s242
    %v244 = vmul.f32 %v243, %v232
    %v245 = vadd.f32 %v241, %v244
    %s246 = sld [smem:[#allocation11 + $0x3]]
    %v247 = vstv %s246
    %v248 = vmul.f32 %v247, %v234
    %v249 = vadd.f32 %v245, %v248
    %s250 = sld [smem:[#allocation8 + $0x4]]
    %s251 = sadd.f32 %s250, %s225
    %v252 = vstv %s251
    %v253 = vadd.f32 %v249, %v252
    %s254 = sld [smem:[#allocation10 + $0x4]]
    %s255 = sadd.f32 %s254, %s225
    %v256 = vstv %s255
    %v257 = vadd.f32 %v249, %v256
    %s258 = ssub.f32 1.0, %s226
    %v259 = vstv %s258
    %v260 = vmul.f32 %v259, %v253
    %v261 = vstv %s226
    %v262 = vmul.f32 %v261, %v257
    %v263 = vadd.f32 %v260, %v262
    %s264 = scalar_lea.vmem [#allocation14], 4
    %265 = vst.msk [vmem:[%s264] ss:$8 sm:$0x3] %vm135, %v263
    %266 = vst.msk [vmem:[%s264] ss:$8 sm:$0x0] %vm135, %v263
    %s267 = sld [smem:[#allocation11 + $0x4]]
    %v268 = vstv %s267
    %v269 = vmul.f32 %v268, %v228
    %s270 = sld [smem:[#allocation11 + $0x5]]
    %v271 = vstv %s270
    %v272 = vmul.f32 %v271, %v230
    %v273 = vadd.f32 %v269, %v272
    %s274 = sld [smem:[#allocation11 + $0x6]]
    %v275 = vstv %s274
    %v276 = vmul.f32 %v275, %v232
    %v277 = vadd.f32 %v273, %v276
    %s278 = sld [smem:[#allocation11 + $0x7]]
    %v279 = vstv %s278
    %v280 = vmul.f32 %v279, %v234
    %v281 = vadd.f32 %v277, %v280
    %s282 = sld [smem:[#allocation8 + $0x5]]
    %s283 = sadd.f32 %s282, %s225
    %v284 = vstv %s283
    %v285 = vadd.f32 %v281, %v284
    %s286 = sld [smem:[#allocation10 + $0x5]]
    %s287 = sadd.f32 %s286, %s225
    %v288 = vstv %s287
    %v289 = vadd.f32 %v281, %v288
    %v290 = vmul.f32 %v259, %v285
    %v291 = vmul.f32 %v261, %v289
    %v292 = vadd.f32 %v290, %v291
    %s293 = scalar_lea.vmem [#allocation14], 5
    %294 = vst.msk [vmem:[%s293] ss:$8 sm:$0x3] %vm135, %v292
    %295 = vst.msk [vmem:[%s293] ss:$8 sm:$0x0] %vm135, %v292
    %s296 = sld [smem:[#allocation11 + $0x8]]
    %v297 = vstv %s296
    %v298 = vmul.f32 %v297, %v228
    %s299 = sld [smem:[#allocation11 + $0x9]]
    %v300 = vstv %s299
    %v301 = vmul.f32 %v300, %v230
    %v302 = vadd.f32 %v298, %v301
    %s303 = sld [smem:[#allocation11 + $0xa]]
    %v304 = vstv %s303
    %v305 = vmul.f32 %v304, %v232
    %v306 = vadd.f32 %v302, %v305
    %s307 = sld [smem:[#allocation11 + $0xb]]
    %v308 = vstv %s307
    %v309 = vmul.f32 %v308, %v234
    %v310 = vadd.f32 %v306, %v309
    %s311 = sld [smem:[#allocation8 + $0x6]]
    %s312 = sadd.f32 %s311, %s225
    %v313 = vstv %s312
    %v314 = vadd.f32 %v310, %v313
    %s315 = sld [smem:[#allocation10 + $0x6]]
    %s316 = sadd.f32 %s315, %s225
    %v317 = vstv %s316
    %v318 = vadd.f32 %v310, %v317
    %v319 = vmul.f32 %v259, %v314
    %v320 = vmul.f32 %v261, %v318
    %v321 = vadd.f32 %v319, %v320
    %s322 = scalar_lea.vmem [#allocation14], 6
    %323 = vst.msk [vmem:[%s322] ss:$8 sm:$0x3] %vm135, %v321
    %324 = vst.msk [vmem:[%s322] ss:$8 sm:$0x0] %vm135, %v321
    %s325 = sld [smem:[#allocation11 + $0xc]]
    %v326 = vstv %s325
    %v327 = vmul.f32 %v326, %v228
    %s328 = sld [smem:[#allocation11 + $0xd]]
    %v329 = vstv %s328
    %v330 = vmul.f32 %v329, %v230
    %v331 = vadd.f32 %v327, %v330
    %s332 = sld [smem:[#allocation11 + $0xe]]
    %v333 = vstv %s332
    %v334 = vmul.f32 %v333, %v232
    %v335 = vadd.f32 %v331, %v334
    %s336 = sld [smem:[#allocation11 + $0xf]]
    %v337 = vstv %s336
    %v338 = vmul.f32 %v337, %v234
    %v339 = vadd.f32 %v335, %v338
    %s340 = sld [smem:[#allocation8 + $0x7]]
    %s341 = sadd.f32 %s340, %s225
    %v342 = vstv %s341
    %v343 = vadd.f32 %v339, %v342
    %s344 = sld [smem:[#allocation10 + $0x7]]
    %s345 = sadd.f32 %s344, %s225
    %v346 = vstv %s345
    %v347 = vadd.f32 %v339, %v346
    %v348 = vmul.f32 %v259, %v343
    %v349 = vmul.f32 %v261, %v347
    %v350 = vadd.f32 %v348, %v349
    %s351 = scalar_lea.vmem [#allocation14], 7
    %352 = vst.msk [vmem:[%s351] ss:$8 sm:$0x3] %vm135, %v350
    %353 = vst.msk [vmem:[%s351] ss:$8 sm:$0x0] %vm135, %v350
    // Predicated region
    $region50: #{tpu_custom_call.1} parent=1 // pred_check
      _
    $region51: #{tpu_custom_call.1} parent=1 // pred_check_branch
      %355 = sbr.rel (0) target = $region53
    $region52: #{tpu_custom_call.1} parent=1 // pred_region
      %s357 = ssub.s32 256, 256
      %358 = vsyncadd [#allocation4], %s357
      %s360 = sshll.u32 [#allocation14], 4
      %s361 = int_to_ptr.vmem [resolvable:$true] %s360
      %363 = dma.vmem_to_hbm [thread:$0]  %s361, 256, %s6, [#allocation4]
    $region53: #{tpu_custom_call.1} parent=1 // pred_fallthru
      _
    // Predicated region
    $region54: #{tpu_custom_call.1} parent=1 // pred_check
      _
    $region55: #{tpu_custom_call.1} parent=1 // pred_check_branch
      %365 = sbr.rel (0) target = $region57
    $region56: #{tpu_custom_call.1} parent=1 // pred_region
      %366 = dma.done [#allocation4], 256
    $region57: #{tpu_custom_call.1} parent=1 // pred_fallthru
      _
    %367 = vsyncpa [#allocation3], 1
    %368 = vsyncpa [#allocation4], 1
    %369 = vsyncpa [#allocation5], 1
    %370 = vsyncpa [#allocation6], 1
    %371 = vsyncpa [#allocation9], 1
    %372 = vsyncpa [#allocation12], 1

</llo_original>
